<compile_context>
chip_gen: v7x
topology: tpu7x:2x2x1
jax: 0.10.0
libtpu: 0.0.40
codegen_flags: <defaults>
</compile_context>

<pallas_src>
import functools

import jax
import jax.numpy as jnp
from jax.experimental import pallas as pl
from jax.experimental.pallas import tpu as pltpu

_LANE = 128


def _rmsnorm_kernel(x_ref, scale_ref, offset_ref, o_ref, *, eps, c):
    # x_ref block: (1, C, T)   scale/offset block: (1, C, 1) f32
    x = x_ref[...].astype(jnp.float32)
    # Sum of squares over the channel (sublane) axis -> (1, 1, T), f32 accum.
    ss = jnp.sum(x * x, axis=1, keepdims=True)
    rms = jnp.sqrt(ss * (1.0 / c))
    inv = 1.0 / (rms + eps)          # exact; tiny reduced array, hidden under DMA
    y = scale_ref[...] * (x * inv) + offset_ref[...]
    o_ref[...] = y.astype(o_ref.dtype)


def _sublane_multiple(itemsize):
    # f32 -> 8, bf16 -> 16, int8/fp8 -> 32 (sub-32-bit dtypes pack along sublanes)
    return max(8, 32 // itemsize)


def _largest_divisor_leq(n, cap):
    """Largest divisor of n that is <= cap (cap >= 1)."""
    best = 1
    i = 1
    while i * i <= n:
        if n % i == 0:
            for d in (i, n // i):
                if d <= cap and d > best:
                    best = d
        i += 1
    return best


def _vmem_limit_bytes():
    """Scoped-VMEM limit, safe on every generation (incl. v7x's 64 MiB per-TC)."""
    limit = 48 * 1024 * 1024
    try:
        cap = int(pltpu.get_tpu_info().vmem_capacity_bytes)
        limit = min(limit, (cap * 3) // 4)
    except Exception:
        pass  # conservative 48 MiB default
    return limit


def _pick_tile(hw, c_padded, itemsize, n_batch, vmem_limit, *,
               min_total_steps=8, floor_lanes=512):
    """Pick the spatial (lane) tile (a multiple of 128) for the (1, C, tile) blocks.

    Sized so the live VMEM per grid step fits the budget, kept above a
    512-lane floor (HBM-roofline efficiency), and capped so the grid keeps a
    handful of steps for pipelining / megacore.  The step-count cap yields to
    the tile floor, not the other way around.
    """
    hw_blocks = -(-hw // _LANE)  # 128-lane blocks covering HW (ceil)

    # Live VMEM per grid step, per 128-lane column of the block:
    #   2x double-buffered input + 2x double-buffered output (I/O dtype)
    # + ~3x f32 temporaries (upcast copy, squares, pre-downcast y).
    bytes_per_block_col = (4 * itemsize + 3 * 4) * c_padded * _LANE
    budget = (vmem_limit * 3) // 4  # headroom for scale/offset & compiler scratch
    cap_vmem = max(1, budget // bytes_per_block_col)

    floor = min(hw_blocks, cap_vmem, max(1, floor_lanes // _LANE))

    # Keep ~min_total_steps grid steps when the shape allows it (pipelining,
    # megacore on v7x), but never below the tile floor.
    per_batch_steps = -(-min_total_steps // max(1, n_batch))
    if hw_blocks > floor:
        cap_steps = max(floor, hw_blocks // per_batch_steps)
    else:
        cap_steps = hw_blocks

    cap = min(cap_vmem, cap_steps, hw_blocks)
    cap = max(cap, floor)

    # Prefer a divisor of hw_blocks (no padded tail) when it stays above the floor.
    if hw % _LANE == 0:
        best = _largest_divisor_leq(hw_blocks, cap)
        if best >= floor:
            return best * _LANE

    return cap * _LANE


def rmsnorm(x, scale, offset, *, eps=1e-6, tile=None):
    """x: (N, C, H, W) float32/bfloat16; scale/offset: (C,). Returns (N, C, H, W)."""
    N, C, H, W = x.shape
    HW = H * W
    itemsize = jnp.dtype(x.dtype).itemsize
    c_padded = -(-C // _sublane_multiple(itemsize)) * _sublane_multiple(itemsize)

    vmem_limit = _vmem_limit_bytes()
    if tile is None:
        tile = _pick_tile(HW, c_padded, itemsize, N, vmem_limit)

    num_tiles = pl.cdiv(HW, tile)
    hw_pad = num_tiles * tile

    x2 = x.reshape(N, C, HW)
    if hw_pad != HW:
        # Pad the spatial axis so every block is full; padded lanes are
        # per-lane independent (zeros -> out = offset, finite) and sliced off.
        x2 = jnp.pad(x2, ((0, 0), (0, 0), (0, hw_pad - HW)))

    # scale/offset kept in f32 (kernel math is f32); tiny, resident blocks.
    scale3 = scale.reshape(1, C, 1).astype(jnp.float32)
    offset3 = offset.reshape(1, C, 1).astype(jnp.float32)

    grid = (N, num_tiles)
    out = pl.pallas_call(
        functools.partial(_rmsnorm_kernel, eps=eps, c=C),
        out_shape=jax.ShapeDtypeStruct((N, C, hw_pad), x.dtype),
        grid_spec=pltpu.PrefetchScalarGridSpec(
            num_scalar_prefetch=0,
            grid=grid,
            in_specs=[
                pl.BlockSpec((1, C, tile), lambda n, t: (n, 0, t)),
                pl.BlockSpec((1, C, 1), lambda n, t: (0, 0, 0)),
                pl.BlockSpec((1, C, 1), lambda n, t: (0, 0, 0)),
            ],
            out_specs=pl.BlockSpec((1, C, tile), lambda n, t: (n, 0, t)),
        ),
        compiler_params=pltpu.CompilerParams(
            dimension_semantics=("parallel", "parallel"),
            vmem_limit_bytes=vmem_limit,
        ),
    )(x2, scale3, offset3)

    if hw_pad != HW:
        out = out[:, :, :HW]
    return out.reshape(N, C, H, W)


def rmsnorm_reference(x, scale, offset, eps=1e-6):
    # Pure-JAX reference mirroring the PyTorch forward exactly (f32 math).
    xf = x.astype(jnp.float32)
    norm_x = jnp.sqrt(jnp.sum(xf * xf, axis=1, keepdims=True))
    c = x.shape[1]
    rms_x = norm_x * (c ** -0.5)
    x_normed = xf / (rms_x + eps)
    out = scale[None, :, None, None] * x_normed + offset[None, :, None, None]
    return out.astype(x.dtype)


if __name__ == "__main__":
    key = jax.random.PRNGKey(0)
    kx, ks, ko = jax.random.split(key, 3)

    N, C, H, W = 2, 4, 16, 16
    x = jax.random.normal(kx, (N, C, H, W), dtype=jnp.float32)
    # Module __init__ uses ones/zeros; perturb deterministically so the
    # affine part is actually exercised.
    scale = jnp.ones((C,), jnp.float32) + 0.1 * jax.random.normal(ks, (C,), jnp.float32)
    offset = jnp.zeros((C,), jnp.float32) + 0.1 * jax.random.normal(ko, (C,), jnp.float32)

    out = rmsnorm(x, scale, offset, eps=1e-6)
    out = jax.block_until_ready(out)

    ref = rmsnorm_reference(x, scale, offset, eps=1e-6)
    assert out.shape == (N, C, H, W)
    # Exact f32 math in-kernel (no approx reciprocal) -> tight tolerance.
    assert jnp.allclose(out, ref, atol=1e-4, rtol=1e-4), "mismatch vs reference"

    print("KERNEL_OK")
</pallas_src>

<mosaic_0001>
module attributes {stable_mosaic.version = 11 : i64} {
  func.func @_rmsnorm_kernel(%arg0: i32, %arg1: i32, %arg2: memref<1x4x256xf32, #tpu.memory_space<vmem>>, %arg3: memref<1x4x1xf32, #tpu.memory_space<vmem>>, %arg4: memref<1x4x1xf32, #tpu.memory_space<vmem>>, %arg5: memref<1x4x256xf32, #tpu.memory_space<vmem>>) attributes {dimension_semantics = [#tpu.dimension_semantics<parallel>, #tpu.dimension_semantics<parallel>], iteration_bounds = array<i64: 2, 1>, scalar_prefetch = 0 : i64, scratch_operands = 0 : i64, tpu.core_type = #tpu.core_type<tc>, window_params = [{transform_indices = @transform_0, window_bounds = array<i64: 1, 4, 256>}, {pipeline_mode = #tpu.pipeline_mode<synchronous>, transform_indices = @transform_1, window_bounds = array<i64: 1, 4, 1>}, {pipeline_mode = #tpu.pipeline_mode<synchronous>, transform_indices = @transform_2, window_bounds = array<i64: 1, 4, 1>}, {transform_indices = @transform_3, window_bounds = array<i64: 1, 4, 256>}]} {
    %c0 = arith.constant 0 : index
    %c0_0 = arith.constant 0 : index
    %c0_1 = arith.constant 0 : index
    %0 = vector.load %arg2[%c0, %c0_0, %c0_1] : memref<1x4x256xf32, #tpu.memory_space<vmem>>, vector<1x4x256xf32>
    %1 = arith.mulf %0, %0 : vector<1x4x256xf32>
    %cst = arith.constant dense<0.000000e+00> : vector<1x256xf32>
    %2 = vector.multi_reduction <add>, %1, %cst [1] : vector<1x4x256xf32> to vector<1x256xf32>
    %3 = vector.shape_cast %2 : vector<1x256xf32> to vector<1x1x256xf32>
    %cst_2 = arith.constant 2.500000e-01 : f32
    %4 = vector.broadcast %cst_2 : f32 to vector<1x1x256xf32>
    %5 = arith.mulf %3, %4 : vector<1x1x256xf32>
    %6 = math.sqrt %5 : vector<1x1x256xf32>
    %cst_3 = arith.constant 9.99999997E-7 : f32
    %7 = vector.broadcast %cst_3 : f32 to vector<1x1x256xf32>
    %8 = arith.addf %6, %7 : vector<1x1x256xf32>
    %cst_4 = arith.constant 1.000000e+00 : f32
    %9 = vector.broadcast %cst_4 : f32 to vector<1x1x256xf32>
    %10 = arith.divf %9, %8 : vector<1x1x256xf32>
    %c0_5 = arith.constant 0 : index
    %c0_6 = arith.constant 0 : index
    %c0_7 = arith.constant 0 : index
    %11 = vector.load %arg3[%c0_5, %c0_6, %c0_7] : memref<1x4x1xf32, #tpu.memory_space<vmem>>, vector<1x4x1xf32>
    %12 = vector.broadcast %10 : vector<1x1x256xf32> to vector<1x4x256xf32>
    %13 = arith.mulf %0, %12 : vector<1x4x256xf32>
    %14 = vector.broadcast %11 : vector<1x4x1xf32> to vector<1x4x256xf32>
    %15 = arith.mulf %14, %13 : vector<1x4x256xf32>
    %c0_8 = arith.constant 0 : index
    %c0_9 = arith.constant 0 : index
    %c0_10 = arith.constant 0 : index
    %16 = vector.load %arg4[%c0_8, %c0_9, %c0_10] : memref<1x4x1xf32, #tpu.memory_space<vmem>>, vector<1x4x1xf32>
    %17 = vector.broadcast %16 : vector<1x4x1xf32> to vector<1x4x256xf32>
    %18 = arith.addf %15, %17 : vector<1x4x256xf32>
    %c0_11 = arith.constant 0 : index
    %c0_12 = arith.constant 0 : index
    %c0_13 = arith.constant 0 : index
    %19 = vector.load %arg5[%c0_11, %c0_12, %c0_13] : memref<1x4x256xf32, #tpu.memory_space<vmem>>, vector<1x4x256xf32>
    tpu.vector_store %arg5[%c0_11, %c0_12, %c0_13], %18 {strides = array<i32>} : memref<1x4x256xf32, #tpu.memory_space<vmem>>, vector<1x4x256xf32>,
    return
  }
  func.func @transform_0(%arg0: i32, %arg1: i32) -> (i32, i32, i32) {
    %c0_i32 = arith.constant 0 : i32
    %c0_i32_0 = arith.constant 0 : i32
    return %arg0, %c0_i32, %arg1 : i32, i32, i32
  }
  func.func @transform_1(%arg0: i32, %arg1: i32) -> (i32, i32, i32) {
    %c0_i32 = arith.constant 0 : i32
    %c0_i32_0 = arith.constant 0 : i32
    %c0_i32_1 = arith.constant 0 : i32
    %c0_i32_2 = arith.constant 0 : i32
    return %c0_i32, %c0_i32_0, %c0_i32_1 : i32, i32, i32
  }
  func.func @transform_2(%arg0: i32, %arg1: i32) -> (i32, i32, i32) {
    %c0_i32 = arith.constant 0 : i32
    %c0_i32_0 = arith.constant 0 : i32
    %c0_i32_1 = arith.constant 0 : i32
    %c0_i32_2 = arith.constant 0 : i32
    return %c0_i32, %c0_i32_0, %c0_i32_1 : i32, i32, i32
  }
  func.func @transform_3(%arg0: i32, %arg1: i32) -> (i32, i32, i32) {
    %c0_i32 = arith.constant 0 : i32
    %c0_i32_0 = arith.constant 0 : i32
    return %arg0, %c0_i32, %arg1 : i32, i32, i32
  }
}

</mosaic_0001>

<llo_original>
// kernel: tpu_custom_call.1
$region0: #{tpu_custom_call.1}
  #allocation0 [shape = 'u32[]', space=smem, size = 0x4, offset = 0x4, fixed_abs, tag = 'smem constant byte address 0x4 - core index']
  #allocation1 [shape = 'u32[144,128]{1,0:T(1,128)}', space=vmem, size = 0x12000, scoped, tag = 'internal scratch']
  %s0 = inlined_call_operand.hbm [shape: f32[2,4,256], index: 0, kind: input, shape index: {}]
  %s1 = inlined_call_operand.vmem [shape: f32[1,4,1], index: 1, kind: input, shape index: {}]
  %s2 = inlined_call_operand.vmem [shape: f32[1,4,1], index: 2, kind: input, shape index: {}]
  %s3 = inlined_call_operand.hbm [shape: f32[2,4,256], index: 3, kind: output, shape index: {}]
  %s4 = sld [smem:[#allocation0]]
  $region49: #{tpu_custom_call.1} parent=0
    _
  %s6 = ssub.s32 1, %s4
  %s7 = scalar_select 0, %s6, %s4
  $region1: #{tpu_custom_call.1} parent=0
    #allocation2 [shape = 'u8[8192]{0}', space=vmem, size = 0x2000, scoped, tag = 'input window, operand 0']
    #allocation3 [shape = 's32[2]{0}', space=sflag, size = 0x8, scoped, tag = 'scoped memory for tpu_custom_call.1']
    #allocation4 [shape = 's32[2]{0}', space=sflag, size = 0x8, scoped, tag = 'scoped memory for tpu_custom_call.1']
    #allocation5 [shape = 'u8[8192]{0}', space=vmem, size = 0x2000, scoped, tag = 'output window, operand 0']
    %8 = vsyncpa [#allocation3], 0
    %s9 = scalar_lea.sflag [#allocation3], 1
    %10 = vsyncpa %s9, 0
    %11 = vsyncpa [#allocation4], 0
    %s12 = scalar_lea.sflag [#allocation4], 1
    %13 = vsyncpa %s12, 0
    loop: start=0, step=1, limit=4
    $region2: #{tpu_custom_call.1} parent=1 // loop_pre_header
      _
    $region3: #{tpu_custom_call.1} parent=1 // loop_header
      %s15 = sphi 0, %s19
      %p16 = scmp.ge.s32.totalorder %s15, 4
      %s22 = sphi 0, %s34
      %s23 = sphi 0, %s30
      %s24 = sphi 0, %s22
      %s25 = sphi 0, %s23
      %s26 = sphi 0, %s24
      %s27 = sphi 0, %s25
      %s39 = sphi 0, %s41
      %s42 = sphi 0, %s39
      %s43 = sphi 0, %s42
      %s59 = sphi 0, %s43
      %s63 = sphi 0, %s63
      %s65 = sphi 0, %s63
      %s66 = sphi 0, %s65
      %s80 = sphi 0, %s66
      %s84 = sphi 0, %s84
      %s86 = sphi 0, %s84
      %s87 = sphi 0, %s86
      %s101 = sphi 0, %s87
      %s109 = sphi 0, %s111
      %s112 = sphi 0, %s109
      %s113 = sphi 0, %s112
      %s129 = sphi 0, %s113
    $region4: #{tpu_custom_call.1} parent=1 // loop_header_branch
      %18 = sbr.rel (%p16) target = $region8
    $region5: #{tpu_custom_call.1} parent=1 // loop_body
      %s20 = ssub.s32 %s15, 1
      %s21 = ssub.s32 %s15, 2
      %s28 = sadd.s32 1, %s23
      %p29 = scmp.ge.s32.totalorder %s28, 1
      %s30 = scalar_select %p29, 0, %s28
      %s31 = sadd.s32 1, %s22
      %s32 = scalar_select %p29, %s31, %s22
      %p33 = scmp.ge.s32.totalorder %s32, 2
      %s34 = scalar_select %p33, 0, %s32
      %s35 = ssub.s32 %s22, %s34
      %s36 = ssub.s32 %s23, %s30
      %s37 = sor.u32 %s35, %s36
      %p38 = scmp.eq.s32.totalorder %s37, 0
      %s40 = sadd.s32 %s39, 1
      %s41 = scalar_select %p38, %s39, %s40
      %p44 = pneg %p38
      %p45 = scmp.eq.s32.totalorder %s15, 1
      %p46 = por %p44, %p45
      %p47 = scmp.ne.s32.totalorder %s39, %s42
      %p48 = scmp.eq.s32.totalorder %s15, 0
      %p49 = por %p47, %p48
      %p50 = scmp.ne.s32.totalorder %s39, %s42
      %p51 = scmp.eq.s32.totalorder %s20, 1
      %p52 = por %p50, %p51
      %p53 = scmp.ne.s32.totalorder %s42, %s43
      %p54 = scmp.eq.s32.totalorder %s20, 0
      %p55 = por %p53, %p54
      %p56 = scmp.ne.s32.totalorder %s42, %s43
      %p57 = scmp.eq.s32.totalorder %s21, 1
      %p58 = por %p56, %p57
      %p60 = scmp.ne.s32.totalorder %s43, %s59
      %p61 = scmp.eq.s32.totalorder %s21, 0
      %p62 = por %p60, %p61
      %s64 = sadd.s32 %s63, 1
      %p67 = scmp.eq.s32.totalorder %s15, 1
      %p68 = scmp.ne.s32.totalorder %s63, %s65
      %p69 = scmp.eq.s32.totalorder %s15, 0
      %p70 = por %p68, %p69
      %p71 = scmp.ne.s32.totalorder %s63, %s65
      %p72 = scmp.eq.s32.totalorder %s20, 1
      %p73 = por %p71, %p72
      %p74 = scmp.ne.s32.totalorder %s65, %s66
      %p75 = scmp.eq.s32.totalorder %s20, 0
      %p76 = por %p74, %p75
      %p77 = scmp.ne.s32.totalorder %s65, %s66
      %p78 = scmp.eq.s32.totalorder %s21, 1
      %p79 = por %p77, %p78
      %p81 = scmp.ne.s32.totalorder %s66, %s80
      %p82 = scmp.eq.s32.totalorder %s21, 0
      %p83 = por %p81, %p82
      %s85 = sadd.s32 %s84, 1
      %p88 = scmp.eq.s32.totalorder %s15, 1
      %p89 = scmp.ne.s32.totalorder %s84, %s86
      %p90 = scmp.eq.s32.totalorder %s15, 0
      %p91 = por %p89, %p90
      %p92 = scmp.ne.s32.totalorder %s84, %s86
      %p93 = scmp.eq.s32.totalorder %s20, 1
      %p94 = por %p92, %p93
      %p95 = scmp.ne.s32.totalorder %s86, %s87
      %p96 = scmp.eq.s32.totalorder %s20, 0
      %p97 = por %p95, %p96
      %p98 = scmp.ne.s32.totalorder %s86, %s87
      %p99 = scmp.eq.s32.totalorder %s21, 1
      %p100 = por %p98, %p99
      %p102 = scmp.ne.s32.totalorder %s87, %s101
      %p103 = scmp.eq.s32.totalorder %s21, 0
      %p104 = por %p102, %p103
      %s105 = ssub.s32 %s22, %s34
      %s106 = ssub.s32 %s23, %s30
      %s107 = sor.u32 %s105, %s106
      %p108 = scmp.eq.s32.totalorder %s107, 0
      %s110 = sadd.s32 %s109, 1
      %s111 = scalar_select %p108, %s109, %s110
      %p114 = pneg %p108
      %p115 = scmp.eq.s32.totalorder %s15, 1
      %p116 = por %p114, %p115
      %p117 = scmp.ne.s32.totalorder %s109, %s112
      %p118 = scmp.eq.s32.totalorder %s15, 0
      %p119 = por %p117, %p118
      %p120 = scmp.ne.s32.totalorder %s109, %s112
      %p121 = scmp.eq.s32.totalorder %s20, 1
      %p122 = por %p120, %p121
      %p123 = scmp.ne.s32.totalorder %s112, %s113
      %p124 = scmp.eq.s32.totalorder %s20, 0
      %p125 = por %p123, %p124
      %p126 = scmp.ne.s32.totalorder %s112, %s113
      %p127 = scmp.eq.s32.totalorder %s21, 1
      %p128 = por %p126, %p127
      %p130 = scmp.ne.s32.totalorder %s113, %s129
      %p131 = scmp.eq.s32.totalorder %s21, 0
      %p132 = por %p130, %p131
      %p133 = scmp.le.s32.totalorder 1, %s15
      %p134 = scmp.lt.s32.totalorder %s15, 3
      %p135 = pnand %p133, %p134
      %p136 = pneg %p135
      // Predicated region
      $region9: #{tpu_custom_call.1} parent=5 // pred_check
        _
      $region10: #{tpu_custom_call.1} parent=5 // pred_check_branch
        %138 = sbr.rel (%p135) target = $region12
      $region11: #{tpu_custom_call.1} parent=5 // pred_region
        %s139 = ssub.s32 %s15, 1
        // Predicated region
        $region13: #{tpu_custom_call.1} parent=11 // pred_check
          %p140 = pneg %p76
        $region14: #{tpu_custom_call.1} parent=11 // pred_check_branch
          %142 = sbr.rel (%p140) target = $region16
        $region15: #{tpu_custom_call.1} parent=11 // pred_region
          _
        $region16: #{tpu_custom_call.1} parent=11 // pred_fallthru
          _
        // Predicated region
        $region17: #{tpu_custom_call.1} parent=11 // pred_check
          %p143 = pneg %p97
        $region18: #{tpu_custom_call.1} parent=11 // pred_check_branch
          %145 = sbr.rel (%p143) target = $region20
        $region19: #{tpu_custom_call.1} parent=11 // pred_region
          _
        $region20: #{tpu_custom_call.1} parent=11 // pred_fallthru
          _
      $region12: #{tpu_custom_call.1} parent=5 // pred_fallthru
        _
      %p146 = scmp.lt.s32.totalorder %s15, 2
      // Predicated region
      $region21: #{tpu_custom_call.1} parent=5 // pred_check
        %p147 = pneg %p146
      $region22: #{tpu_custom_call.1} parent=5 // pred_check_branch
        %149 = sbr.rel (%p147) target = $region24
      $region23: #{tpu_custom_call.1} parent=5 // pred_region
        // Predicated region
        $region25: #{tpu_custom_call.1} parent=23 // pred_check
          %p150 = pneg %p49
        $region26: #{tpu_custom_call.1} parent=23 // pred_check_branch
          %152 = sbr.rel (%p150) target = $region28
        $region27: #{tpu_custom_call.1} parent=23 // pred_region
          %s153 = sand.u32 %s39, 1
          %s154 = scalar_lea.sflag [#allocation3], %s153
          %s155 = sand.u32 %s39, 1
          %s156 = smul.addr %s155, 8
          %s157 = scalar_lea.vmem [#allocation2], %s156
          %s158 = smul.u32 2, %s23
          %s160 = ssub.s32 128, 128
          %161 = vsyncadd %s154, %s160
          %s162 = smul.addr %s22, 2
          %s163 = sadd.s32 %s158, %s162
          %s164 = smul.addr %s163, 64
          %s165 = scalar_lea.hbm %s0, %s164
          %s167 = sshll.u32 %s157, 4
          %s168 = int_to_ptr.vmem [resolvable:$true] %s167
          %170 = dma.hbm_to_vmem [thread:$0]  %s165, 128, %s168, %s154
        $region28: #{tpu_custom_call.1} parent=23 // pred_fallthru
          _
      $region24: #{tpu_custom_call.1} parent=5 // pred_fallthru
        _
      %p171 = scmp.le.s32.totalorder 1, %s15
      %p172 = scmp.lt.s32.totalorder %s15, 3
      %p173 = pnand %p171, %p172
      %p174 = pneg %p173
      // Predicated region
      $region29: #{tpu_custom_call.1} parent=5 // pred_check
        _
      $region30: #{tpu_custom_call.1} parent=5 // pred_check_branch
        %176 = sbr.rel (%p173) target = $region32
      $region31: #{tpu_custom_call.1} parent=5 // pred_region
        %s177 = ssub.s32 %s15, 1
        %s178 = sand.u32 %s42, 1
        %s179 = scalar_lea.sflag [#allocation3], %s178
        %s180 = sand.u32 %s42, 1
        %s181 = smul.addr %s180, 8
        %s182 = scalar_lea.vmem [#allocation2], %s181
        // Predicated region
        $region33: #{tpu_custom_call.1} parent=31 // pred_check
          %p183 = pneg %p55
        $region34: #{tpu_custom_call.1} parent=31 // pred_check_branch
          %185 = sbr.rel (%p183) target = $region36
        $region35: #{tpu_custom_call.1} parent=31 // pred_region
          %186 = dma.done %s179, 128
        $region36: #{tpu_custom_call.1} parent=31 // pred_fallthru
          _
        %s187 = sand.u32 %s42, 1
        %s188 = scalar_lea.sflag [#allocation3], %s187
        %s189 = sand.u32 %s42, 1
        %s190 = smul.addr %s189, 8
        %s191 = scalar_lea.vmem [#allocation2], %s190
        %p192 = pneg %p55
        %p193 = pneg %p52
        %p194 = pneg %p76
        %p195 = pneg %p73
        %p196 = pneg %p97
        %p197 = pneg %p94
        %p198 = pneg %p125
        %p199 = pneg %p122
        %s200 = sand.u32 %s112, 1
        %s201 = scalar_lea.sflag [#allocation4], %s200
        %s202 = sand.u32 %s112, 1
        %s203 = smul.addr %s202, 8
        %s204 = scalar_lea.vmem [#allocation5], %s203
        %s205 = smul.u32 2, %s25
        %s206 = smul.u32 2, %s25
        %v207 = vld [vmem:[%s182] sm:$0xff]
        %v208 = vmul.f32 %v207, %v207
        %v210 = vcombine.high %v208, %v208
        %vm212 = vcmask 1043456
        %v213 = vsel %vm212, %v208, 0.0
        %v214 = vrot.slane %v213, 4
        %v215 = vadd.f32 %v213, %v214
        %v216 = vrot.slane %v215, 2
        %v217 = vadd.f32 %v215, %v216
        %v218 = vrot.slane %v217, 1
        %v219 = vadd.f32 %v217, %v218
        %v220 = vsel %vm212, %v210, 0.0
        %v221 = vrot.slane %v220, 4
        %v222 = vadd.f32 %v220, %v221
        %v223 = vrot.slane %v222, 2
        %v224 = vadd.f32 %v222, %v223
        %v225 = vrot.slane %v224, 1
        %v226 = vadd.f32 %v224, %v225
        %v227 = vmul.f32 %v219, 0.25
        %v228 = vmul.f32 %v226, 0.25
        %v229 = vrsqrt.pop %v227
        %v230 = vmul.f32 %v227, %v229
        %vm231 = vcmp.eq.f32.partialorder %v227, inf
        %v232 = vsel %vm231, %v227, %v230
        %vm233 = vcmp.eq.f32.partialorder %v227, 0.0
        %v234 = vand.u32 %v227, 2147483648
        %v235 = vsel %vm233, %v234, %v232
        %v236 = vrsqrt.pop %v228
        %v237 = vmul.f32 %v228, %v236
        %vm238 = vcmp.eq.f32.partialorder %v228, inf
        %v239 = vsel %vm238, %v228, %v237
        %vm240 = vcmp.eq.f32.partialorder %v228, 0.0
        %v241 = vand.u32 %v228, 2147483648
        %v242 = vsel %vm240, %v241, %v239
        %v243 = vadd.f32 %v235, 1e-06
        %v244 = vadd.f32 %v242, 1e-06
        %v245 = vrcp.pop %v243
        %v246 = vmul.f32 1.0, %v245
        %v247 = vrcp.pop %v244
        %v248 = vmul.f32 1.0, %v247
        %v249 = vld [vmem:[%s1] sm:$0xf]
        %v252 = vcombine.low %v246, %v248
        %v254 = vmul.f32 %v207, %v252
        %256 = vset.pattern.permute.xlu0 0
        %257 = vperm.xlu0 %256, %v249
        %v258 = vpop.permute.xlu0 %257
        %v261 = vcombine.high %v254, %v254
        %v263 = vmul.f32 %v258, %v254
        %v264 = vmul.f32 %v258, %v261
        %v265 = vld [vmem:[%s2] sm:$0xf]
        %267 = vset.pattern.permute.xlu0 0
        %268 = vperm.xlu0 %267, %v265
        %v269 = vpop.permute.xlu0 %268
        %v271 = vadd.f32 %v263, %v269
        %v272 = vadd.f32 %v264, %v269
        %v275 = vcombine.low %v271, %v272
        %277 = vst [vmem:[%s204] sm:$0xff] %v275
        %s278 = sand.u32 %s112, 1
        %s279 = scalar_lea.sflag [#allocation4], %s278
        %s280 = sand.u32 %s112, 1
        %s281 = smul.addr %s280, 8
        %s282 = scalar_lea.vmem [#allocation5], %s281
        // Predicated region
        $region37: #{tpu_custom_call.1} parent=31 // pred_check
          %p283 = pneg %p122
        $region38: #{tpu_custom_call.1} parent=31 // pred_check_branch
          %285 = sbr.rel (%p283) target = $region40
        $region39: #{tpu_custom_call.1} parent=31 // pred_region
          %s286 = smul.u32 2, %s25
          %s288 = ssub.s32 128, 128
          %289 = vsyncadd %s279, %s288
          %s290 = smul.addr %s24, 2
          %s291 = sadd.s32 %s286, %s290
          %s292 = smul.addr %s291, 64
          %s293 = scalar_lea.hbm %s3, %s292
          %s295 = sshll.u32 %s282, 4
          %s296 = int_to_ptr.vmem [resolvable:$true] %s295
          %298 = dma.vmem_to_hbm [thread:$0]  %s296, 128, %s293, %s279
        $region40: #{tpu_custom_call.1} parent=31 // pred_fallthru
          _
      $region32: #{tpu_custom_call.1} parent=5 // pred_fallthru
        _
      %p299 = scmp.le.s32.totalorder 2, %s15
      // Predicated region
      $region41: #{tpu_custom_call.1} parent=5 // pred_check
        %p300 = pneg %p299
      $region42: #{tpu_custom_call.1} parent=5 // pred_check_branch
        %302 = sbr.rel (%p300) target = $region44
      $region43: #{tpu_custom_call.1} parent=5 // pred_region
        %s303 = ssub.s32 %s15, 2
        // Predicated region
        $region45: #{tpu_custom_call.1} parent=43 // pred_check
          %p304 = pneg %p128
        $region46: #{tpu_custom_call.1} parent=43 // pred_check_branch
          %306 = sbr.rel (%p304) target = $region48
        $region47: #{tpu_custom_call.1} parent=43 // pred_region
          %s307 = sand.u32 %s113, 1
          %s308 = scalar_lea.sflag [#allocation4], %s307
          %s309 = sand.u32 %s113, 1
          %s310 = smul.addr %s309, 8
          %s311 = scalar_lea.vmem [#allocation5], %s310
          %312 = dma.done %s308, 128
        $region48: #{tpu_custom_call.1} parent=43 // pred_fallthru
          _
      $region44: #{tpu_custom_call.1} parent=5 // pred_fallthru
        _
    $region6: #{tpu_custom_call.1} parent=1 // loop_footer
      %s19 = sadd.s32 1, %s15
    $region7: #{tpu_custom_call.1} parent=1 // loop_footer_branch
      %14 = sbr.rel target = $region3
    $region8: #{tpu_custom_call.1} parent=1 // loop_exit
      _
    %313 = vsyncpa [#allocation3], 1
    %s314 = scalar_lea.sflag [#allocation3], 1
    %315 = vsyncpa %s314, 1
    %316 = vsyncpa [#allocation4], 1
    %s317 = scalar_lea.sflag [#allocation4], 1
    %318 = vsyncpa %s317, 1

</llo_original>
